<compile_context>
chip_gen: v7x
topology: tpu7x:2x2x1
jax: 0.10.0
libtpu: 0.0.40
codegen_flags: <defaults>
</compile_context>

<pallas_src>
import jax
import jax.numpy as jnp
from jax.experimental import pallas as pl
from jax.experimental.pallas import tpu as pltpu


def _round_up(x: int, m: int) -> int:
    return (x + m - 1) // m * m


def _linear_kernel(x_ref, w_ref, b_ref, o_ref, acc_ref):
    """One (tm, tn) output tile; K is the innermost ('arbitrary') grid axis."""
    k = pl.program_id(2)

    @pl.when(k == 0)
    def _():
        acc_ref[...] = jnp.zeros_like(acc_ref)

    # MXU matmul in bf16 with f32 accumulation.
    acc_ref[...] += jnp.dot(x_ref[...], w_ref[...],
                            preferred_element_type=jnp.float32)

    # Epilogue: bias added exactly once, then cast + lane-dense store.
    @pl.when(k == pl.num_programs(2) - 1)
    def _():
        o_ref[...] = (acc_ref[...] + b_ref[...]).astype(o_ref.dtype)


def abc_model_forward(x, w, b, *, tm=256, tn=256, tk=256):
    """y = x @ w + b  (x: [M, K], w: [K, N], b: [1, N]) via a tiled Pallas matmul.

    x / w are fed to the MXU in bfloat16; accumulation and bias-add are f32.
    Inputs are zero-padded up to tile multiples and the result sliced back.
    """
    M, K = x.shape
    Kw, N = w.shape
    assert K == Kw and b.shape == (1, N)
    out_dtype = x.dtype

    # Effective tile sizes: 256-aligned targets, clamped for tiny problems.
    # M-tile multiple of 8 (sublane); N/K tiles multiples of 128 (lane-dense).
    tm_eff = min(tm, _round_up(M, 8))
    tn_eff = min(tn, _round_up(N, 128))
    tk_eff = min(tk, _round_up(K, 128))

    Mp = _round_up(M, tm_eff)
    Np = _round_up(N, tn_eff)
    Kp = _round_up(K, tk_eff)

    # Pad + cast compute inputs to bf16 (zero padding along K is a no-op for
    # the matmul; padded M/N rows/cols are sliced off below).
    x_p = jnp.zeros((Mp, Kp), jnp.bfloat16).at[:M, :K].set(x.astype(jnp.bfloat16))
    w_p = jnp.zeros((Kp, Np), jnp.bfloat16).at[:K, :N].set(w.astype(jnp.bfloat16))
    b_p = jnp.zeros((1, Np), jnp.float32).at[:, :N].set(b.astype(jnp.float32))

    grid = (Mp // tm_eff, Np // tn_eff, Kp // tk_eff)

    out_p = pl.pallas_call(
        _linear_kernel,
        out_shape=jax.ShapeDtypeStruct((Mp, Np), out_dtype),
        grid_spec=pltpu.PrefetchScalarGridSpec(
            num_scalar_prefetch=0,
            grid=grid,
            in_specs=[
                pl.BlockSpec((tm_eff, tk_eff), lambda i, j, k: (i, k)),
                pl.BlockSpec((tk_eff, tn_eff), lambda i, j, k: (k, j)),
                pl.BlockSpec((1, tn_eff), lambda i, j, k: (0, j)),
            ],
            out_specs=pl.BlockSpec((tm_eff, tn_eff), lambda i, j, k: (i, j)),
            scratch_shapes=[pltpu.VMEM((tm_eff, tn_eff), jnp.float32)],
        ),
        compiler_params=pltpu.CompilerParams(
            dimension_semantics=("parallel", "parallel", "arbitrary"),
            vmem_limit_bytes=64 << 20,  # within v7x's 64 MiB physical VMEM
        ),
    )(x_p, w_p, b_p)

    return out_p[:M, :N]


class ABCModelJax:
    """JAX-side mirror of ABCModel's concrete bits (metadata + forward)."""

    def __init__(self, cfg):
        self._name = "ABCModel"
        self._version = "1.0"
        self._cfg = cfg
        hidden = cfg["hidden"]
        # Deterministic parameter init (synthetic; no checkpoint load).
        kw, kb = jax.random.split(jax.random.PRNGKey(42))
        self.w = (jax.random.normal(kw, (hidden, hidden), jnp.float32)
                  * (1.0 / jnp.sqrt(hidden)))
        self.b = jax.random.normal(kb, (1, hidden), jnp.float32) * 0.01

    @property
    def param_size(self):
        return self.w.size + self.b.size

    @property
    def name(self):
        return f"{self._name} {self._version}({self.param_size})"

    # TODO(synk): reset_optimizer / DDP handling / from_pretrained / device
    # properties are host-side training & IO plumbing with no Pallas-kernel
    # equivalent.

    def forward(self, x):
        # x: [batch, seq, hidden]  ->  y: [batch, seq, hidden]
        B, S, H = x.shape
        y2d = abc_model_forward(x.reshape(B * S, H), self.w, self.b)
        return y2d.reshape(B, S, H)


def _ref_linear_bf16(x2d, w, b):
    """Pure-JAX reference matching the kernel's bf16-in / f32-acc numerics."""
    return jnp.dot(x2d.astype(jnp.bfloat16), w.astype(jnp.bfloat16),
                   preferred_element_type=jnp.float32) + b.astype(jnp.float32)


if __name__ == "__main__":
    # --- small config consistent with the module interface ---
    cfg = {"hidden": 32, "lr": 1e-3, "decay": 0.01}
    model = ABCModelJax(cfg)

    batch, seq, hidden = 2, 8, 32
    x = jax.random.normal(jax.random.PRNGKey(0), (batch, seq, hidden), jnp.float32)

    y = model.forward(x)
    y = jax.block_until_ready(y)

    y_ref = _ref_linear_bf16(x.reshape(-1, hidden), model.w, model.b)
    assert jnp.allclose(y.reshape(-1, hidden), y_ref, atol=1e-2, rtol=1e-2), \
        "small-shape mismatch vs reference"

    # --- second check exercising a multi-tile (M, N, K) grid + K epilogue ---
    M2, K2, N2 = 384, 320, 384
    k0, k1, k2 = jax.random.split(jax.random.PRNGKey(1), 3)
    x2 = jax.random.normal(k0, (M2, K2), jnp.float32)
    w2 = jax.random.normal(k1, (K2, N2), jnp.float32) * (1.0 / jnp.sqrt(K2))
    b2 = jax.random.normal(k2, (1, N2), jnp.float32) * 0.01

    y2 = jax.block_until_ready(abc_model_forward(x2, w2, b2))
    y2_ref = _ref_linear_bf16(x2, w2, b2)
    assert jnp.allclose(y2, y2_ref, atol=2e-2, rtol=2e-2), \
        "tiled-shape mismatch vs reference"

    print("KERNEL_OK")
</pallas_src>

<mosaic_0001>
module attributes {stable_mosaic.version = 11 : i64} {
  func.func @_linear_kernel(%arg0: i32, %arg1: i32, %arg2: i32, %arg3: memref<16x128xbf16, #tpu.memory_space<vmem>>, %arg4: memref<128x128xbf16, #tpu.memory_space<vmem>>, %arg5: memref<1x128xf32, #tpu.memory_space<vmem>>, %arg6: memref<16x128xf32, #tpu.memory_space<vmem>>, %arg7: memref<16x128xf32, #tpu.memory_space<vmem>>) attributes {dimension_semantics = [#tpu.dimension_semantics<parallel>, #tpu.dimension_semantics<parallel>, #tpu.dimension_semantics<arbitrary>], iteration_bounds = array<i64: 1, 1, 1>, scalar_prefetch = 0 : i64, scratch_operands = 1 : i64, tpu.core_type = #tpu.core_type<tc>, window_params = [{transform_indices = @transform_0, window_bounds = array<i64: 16, 128>}, {transform_indices = @transform_1, window_bounds = array<i64: 128, 128>}, {transform_indices = @transform_2, window_bounds = array<i64: 1, 128>}, {transform_indices = @transform_3, window_bounds = array<i64: 16, 128>}]} {
    %c0_i32 = arith.constant 0 : i32
    %0 = arith.cmpi eq, %arg2, %c0_i32 : i32
    %1 = arith.extui %0 : i1 to i32
    %c0_i32_0 = arith.constant 0 : i32
    %2 = arith.cmpi ne, %1, %c0_i32_0 : i32
    scf.if %2 {
      %cst_10 = arith.constant 0.000000e+00 : f32
      %12 = vector.broadcast %cst_10 : f32 to vector<16x128xf32>
      %c0_11 = arith.constant 0 : index
      %c0_12 = arith.constant 0 : index
      %13 = vector.load %arg7[%c0_11, %c0_12] : memref<16x128xf32, #tpu.memory_space<vmem>>, vector<16x128xf32>
      tpu.vector_store %arg7[%c0_11, %c0_12], %12 {strides = array<i32>} : memref<16x128xf32, #tpu.memory_space<vmem>>, vector<16x128xf32>,
    } else {
    }
    %c0 = arith.constant 0 : index
    %c0_1 = arith.constant 0 : index
    %3 = vector.load %arg7[%c0, %c0_1] : memref<16x128xf32, #tpu.memory_space<vmem>>, vector<16x128xf32>
    %c0_2 = arith.constant 0 : index
    %c0_3 = arith.constant 0 : index
    %4 = vector.load %arg3[%c0_2, %c0_3] : memref<16x128xbf16, #tpu.memory_space<vmem>>, vector<16x128xbf16>
    %c0_4 = arith.constant 0 : index
    %c0_5 = arith.constant 0 : index
    %5 = vector.load %arg4[%c0_4, %c0_5] : memref<128x128xbf16, #tpu.memory_space<vmem>>, vector<128x128xbf16>
    %cst = arith.constant dense<0.000000e+00> : vector<16x128xf32>
    %6 = tpu.matmul %4, %5, %cst {dimension_numbers = #tpu.dot_dimension_numbers<[1], [0], [0], [1], [0, 0, 1, 1], [], []>} : vector<16x128xbf16>, vector<128x128xbf16>, vector<16x128xf32> -> vector<16x128xf32>
    %7 = arith.addf %3, %6 : vector<16x128xf32>
    %c0_6 = arith.constant 0 : index
    %c0_7 = arith.constant 0 : index
    %8 = vector.load %arg7[%c0_6, %c0_7] : memref<16x128xf32, #tpu.memory_space<vmem>>, vector<16x128xf32>
    tpu.vector_store %arg7[%c0_6, %c0_7], %7 {strides = array<i32>} : memref<16x128xf32, #tpu.memory_space<vmem>>, vector<16x128xf32>,
    %c0_i32_8 = arith.constant 0 : i32
    %9 = arith.cmpi eq, %arg2, %c0_i32_8 : i32
    %10 = arith.extui %9 : i1 to i32
    %c0_i32_9 = arith.constant 0 : i32
    %11 = arith.cmpi ne, %10, %c0_i32_9 : i32
    scf.if %11 {
      %c0_10 = arith.constant 0 : index
      %c0_11 = arith.constant 0 : index
      %12 = vector.load %arg7[%c0_10, %c0_11] : memref<16x128xf32, #tpu.memory_space<vmem>>, vector<16x128xf32>
      %c0_12 = arith.constant 0 : index
      %c0_13 = arith.constant 0 : index
      %13 = vector.load %arg5[%c0_12, %c0_13] : memref<1x128xf32, #tpu.memory_space<vmem>>, vector<1x128xf32>
      %14 = vector.broadcast %13 : vector<1x128xf32> to vector<16x128xf32>
      %15 = arith.addf %12, %14 : vector<16x128xf32>
      %c0_14 = arith.constant 0 : index
      %c0_15 = arith.constant 0 : index
      %16 = vector.load %arg6[%c0_14, %c0_15] : memref<16x128xf32, #tpu.memory_space<vmem>>, vector<16x128xf32>
      tpu.vector_store %arg6[%c0_14, %c0_15], %15 {strides = array<i32>} : memref<16x128xf32, #tpu.memory_space<vmem>>, vector<16x128xf32>,
    } else {
    }
    return
  }
  func.func @transform_0(%arg0: i32, %arg1: i32, %arg2: i32) -> (i32, i32) {
    %c0_i32 = arith.constant 0 : i32
    return %arg0, %arg2 : i32, i32
  }
  func.func @transform_1(%arg0: i32, %arg1: i32, %arg2: i32) -> (i32, i32) {
    %c0_i32 = arith.constant 0 : i32
    return %arg2, %arg1 : i32, i32
  }
  func.func @transform_2(%arg0: i32, %arg1: i32, %arg2: i32) -> (i32, i32) {
    %c0_i32 = arith.constant 0 : i32
    %c0_i32_0 = arith.constant 0 : i32
    return %c0_i32, %arg1 : i32, i32
  }
  func.func @transform_3(%arg0: i32, %arg1: i32, %arg2: i32) -> (i32, i32) {
    %c0_i32 = arith.constant 0 : i32
    return %arg0, %arg1 : i32, i32
  }
}

</mosaic_0001>

<llo_original>
// kernel: tpu_custom_call.1
$region0: #{tpu_custom_call.1}
  #allocation0 [shape = 'u32[]', space=smem, size = 0x4, offset = 0x4, fixed_abs, tag = 'smem constant byte address 0x4 - core index']
  #allocation1 [shape = 'u32[144,128]{1,0:T(1,128)}', space=vmem, size = 0x12000, scoped, tag = 'internal scratch']
  #allocation2 [shape = 'f32[16,128]{1,0:T(8,128)}', space=vmem, size = 0x2000, scoped, tag = 'scratch operand']
  %s0 = inlined_call_operand.hbm [shape: bf16[16,128], index: 0, kind: input, shape index: {}]
  %s1 = inlined_call_operand.hbm [shape: bf16[128,128], index: 1, kind: input, shape index: {}]
  %s2 = inlined_call_operand.hbm [shape: f32[1,128], index: 2, kind: input, shape index: {}]
  %s3 = inlined_call_operand.hbm [shape: f32[16,128], index: 3, kind: output, shape index: {}]
  %s4 = sld [smem:[#allocation0]]
  $region42: #{tpu_custom_call.1} parent=0
    _
  %s6 = ssub.s32 1, %s4
  %s7 = scalar_select 0, %s6, %s4
  $region1: #{tpu_custom_call.1} parent=0
    #allocation3 [shape = 'u8[4096]{0}', space=vmem, size = 0x1000, scoped, tag = 'input window, operand 0, single buffered']
    #allocation4 [shape = 's32[1]{0}', space=sflag, size = 0x4, scoped, tag = 'scoped memory for tpu_custom_call.1']
    #allocation5 [shape = 's32[1]{0}', space=sflag, size = 0x4, scoped, tag = 'scoped memory for tpu_custom_call.1']
    #allocation6 [shape = 'u8[32768]{0}', space=vmem, size = 0x8000, scoped, tag = 'input window, operand 1, single buffered']
    #allocation7 [shape = 's32[1]{0}', space=sflag, size = 0x4, scoped, tag = 'scoped memory for tpu_custom_call.1']
    #allocation8 [shape = 'u8[512]{0}', space=vmem, size = 0x400, scoped, tag = 'input window, operand 2, single buffered']
    #allocation9 [shape = 'u8[8192]{0}', space=vmem, size = 0x2000, scoped, tag = 'output window, operand 0, single buffered']
    %8 = vsyncpa [#allocation4], 0
    %9 = vsyncpa [#allocation7], 0
    %10 = vsyncpa [#allocation5], 0
    // Predicated region
    $region2: #{tpu_custom_call.1} parent=1 // pred_check
      _
    $region3: #{tpu_custom_call.1} parent=1 // pred_check_branch
      %12 = sbr.rel (0) target = $region5
    $region4: #{tpu_custom_call.1} parent=1 // pred_region
      %s14 = ssub.s32 128, 128
      %15 = vsyncadd [#allocation4], %s14
      %s16 = sshll.u32 [#allocation3], 4
      %s17 = int_to_ptr.vmem [resolvable:$true] %s16
      %22 = dma.hbm_to_vmem [thread:$0]  %s0, 128, %s17, [#allocation4], 64, 64, 4
    $region5: #{tpu_custom_call.1} parent=1 // pred_fallthru
      _
    // Predicated region
    $region6: #{tpu_custom_call.1} parent=1 // pred_check
      _
    $region7: #{tpu_custom_call.1} parent=1 // pred_check_branch
      %24 = sbr.rel (0) target = $region9
    $region8: #{tpu_custom_call.1} parent=1 // pred_region
      %s26 = ssub.s32 1024, 1024
      %27 = vsyncadd [#allocation7], %s26
      %s28 = sshll.u32 [#allocation6], 4
      %s29 = int_to_ptr.vmem [resolvable:$true] %s28
      %34 = dma.hbm_to_vmem [thread:$0]  %s1, 1024, %s29, [#allocation7], 64, 64, 4
    $region9: #{tpu_custom_call.1} parent=1 // pred_fallthru
      _
    // Predicated region
    $region10: #{tpu_custom_call.1} parent=1 // pred_check
      _
    $region11: #{tpu_custom_call.1} parent=1 // pred_check_branch
      %36 = sbr.rel (0) target = $region13
    $region12: #{tpu_custom_call.1} parent=1 // pred_region
      %s38 = ssub.s32 16, 16
      %39 = vsyncadd [#allocation7], %s38
      %s41 = sshll.u32 [#allocation8], 4
      %s42 = int_to_ptr.vmem [resolvable:$true] %s41
      %44 = dma.hbm_to_vmem [thread:$0]  %s2, 16, %s42, [#allocation7]
    $region13: #{tpu_custom_call.1} parent=1 // pred_fallthru
      _
    // Predicated region
    $region14: #{tpu_custom_call.1} parent=1 // pred_check
      _
    $region15: #{tpu_custom_call.1} parent=1 // pred_check_branch
      %46 = sbr.rel (0) target = $region17
    $region16: #{tpu_custom_call.1} parent=1 // pred_region
      %47 = dma.done [#allocation4], 128
    $region17: #{tpu_custom_call.1} parent=1 // pred_fallthru
      _
    // Predicated region
    $region18: #{tpu_custom_call.1} parent=1 // pred_check
      _
    $region19: #{tpu_custom_call.1} parent=1 // pred_check_branch
      %49 = sbr.rel (0) target = $region21
    $region20: #{tpu_custom_call.1} parent=1 // pred_region
      %50 = dma.done [#allocation7], 1024
    $region21: #{tpu_custom_call.1} parent=1 // pred_fallthru
      _
    // Predicated region
    $region22: #{tpu_custom_call.1} parent=1 // pred_check
      _
    $region23: #{tpu_custom_call.1} parent=1 // pred_check_branch
      %52 = sbr.rel (0) target = $region25
    $region24: #{tpu_custom_call.1} parent=1 // pred_region
      %53 = dma.done [#allocation7], 16
    $region25: #{tpu_custom_call.1} parent=1 // pred_fallthru
      _
    %p55 = scmp.eq.s32.totalorder 0, 0
    // Predicated region
    $region26: #{tpu_custom_call.1} parent=1 // pred_check
      %p56 = pneg %p55
    $region27: #{tpu_custom_call.1} parent=1 // pred_check_branch
      %58 = sbr.rel (%p56) target = $region29
    $region28: #{tpu_custom_call.1} parent=1 // pred_region
      %59 = vst [vmem:[#allocation2] sm:$0xff] 0.0
      %60 = vst [vmem:[#allocation2 + $0x8] sm:$0xff] 0.0
    $region29: #{tpu_custom_call.1} parent=1 // pred_fallthru
      _
    %v61 = vld [vmem:[#allocation2] sm:$0xff]
    %v62 = vld [vmem:[#allocation2 + $0x8] sm:$0xff]
    %v63 = vld [vmem:[#allocation3] sm:$0xf]
    %v64 = vld [vmem:[#allocation3 + $0x4] sm:$0xf]
    %v65 = vld [vmem:[#allocation6] sm:$0xf]
    %v66 = vld [vmem:[#allocation6 + $0x4] sm:$0xf]
    %v67 = vld [vmem:[#allocation6 + $0x8] sm:$0xf]
    %v68 = vld [vmem:[#allocation6 + $0xc] sm:$0xf]
    %v69 = vld [vmem:[#allocation6 + $0x10] sm:$0xf]
    %v70 = vld [vmem:[#allocation6 + $0x14] sm:$0xf]
    %v71 = vld [vmem:[#allocation6 + $0x18] sm:$0xf]
    %v72 = vld [vmem:[#allocation6 + $0x1c] sm:$0xf]
    %v73 = vld [vmem:[#allocation6 + $0x20] sm:$0xf]
    %v74 = vld [vmem:[#allocation6 + $0x24] sm:$0xf]
    %v75 = vld [vmem:[#allocation6 + $0x28] sm:$0xf]
    %v76 = vld [vmem:[#allocation6 + $0x2c] sm:$0xf]
    %v77 = vld [vmem:[#allocation6 + $0x30] sm:$0xf]
    %v78 = vld [vmem:[#allocation6 + $0x34] sm:$0xf]
    %v79 = vld [vmem:[#allocation6 + $0x38] sm:$0xf]
    %v80 = vld [vmem:[#allocation6 + $0x3c] sm:$0xf]
    %v83 = vunpack.c.l.b16 %v63
    %v84 = vunpack.c.l.b16 %v64
    %v85 = vpack.c.b16 %v84, %v83
    %v103 = vunpack.c.l.b16 %v65
    %v104 = vunpack.c.l.b16 %v66
    %v105 = vunpack.c.l.b16 %v67
    %v106 = vunpack.c.l.b16 %v68
    %v107 = vunpack.c.l.b16 %v69
    %v108 = vunpack.c.l.b16 %v70
    %v109 = vunpack.c.l.b16 %v71
    %v110 = vunpack.c.l.b16 %v72
    %v111 = vunpack.c.l.b16 %v73
    %v112 = vunpack.c.l.b16 %v74
    %v113 = vunpack.c.l.b16 %v75
    %v114 = vunpack.c.l.b16 %v76
    %v115 = vunpack.c.l.b16 %v77
    %v116 = vunpack.c.l.b16 %v78
    %v117 = vunpack.c.l.b16 %v79
    %v118 = vunpack.c.l.b16 %v80
    %v119 = vpack.c.b16 %v104, %v103
    %v120 = vpack.c.b16 %v106, %v105
    %v121 = vpack.c.b16 %v108, %v107
    %v122 = vpack.c.b16 %v110, %v109
    %v123 = vpack.c.b16 %v112, %v111
    %v124 = vpack.c.b16 %v114, %v113
    %v125 = vpack.c.b16 %v116, %v115
    %v126 = vpack.c.b16 %v118, %v117
    %135 = vmatprep.subr.bf16.mxu0 0
    %136 = vmatpush1.bf16.msra.mxu0 %v119
    %137 = vmatprep.subr.bf16.mxu0 0
    %138 = vmatpush1.bf16.msra.mxu0 %v120
    %139 = vmatprep.subr.bf16.mxu0 0
    %140 = vmatpush1.bf16.msra.mxu0 %v121
    %141 = vmatprep.subr.bf16.mxu0 0
    %142 = vmatpush1.bf16.msra.mxu0 %v122
    %143 = vmatprep.subr.bf16.mxu0 0
    %144 = vmatpush1.bf16.msra.mxu0 %v123
    %145 = vmatprep.subr.bf16.mxu0 0
    %146 = vmatpush1.bf16.msra.mxu0 %v124
    %147 = vmatprep.subr.bf16.mxu0 0
    %148 = vmatpush1.bf16.msra.mxu0 %v125
    %149 = vmatprep.subr.bf16.mxu0 0
    %150 = vmatpush1.bf16.msra.mxu0 %v126
    %151 = vmatprep.subr.bf16.mxu0 0
    %152 = vmatpush1.bf16.msra.mxu0 0
    %153 = vmatprep.subr.bf16.mxu0 0
    %154 = vmatpush1.bf16.msra.mxu0 0
    %155 = vmatprep.subr.bf16.mxu0 0
    %156 = vmatpush1.bf16.msra.mxu0 0
    %157 = vmatprep.subr.bf16.mxu0 0
    %158 = vmatpush1.bf16.msra.mxu0 0
    %159 = vmatprep.subr.bf16.mxu0 0
    %160 = vmatpush1.bf16.msra.mxu0 0
    %161 = vmatprep.subr.bf16.mxu0 0
    %162 = vmatpush1.bf16.msra.mxu0 0
    %163 = vmatprep.subr.bf16.mxu0 0
    %164 = vmatpush1.bf16.msra.mxu0 0
    %165 = vmatprep.subr.bf16.mxu0 0
    %166 = vmatpush1.bf16.msra.mxu0 0
    %167 = vmatprep.mubr.bf16.mxu0 0
    %168 = vmatmul.mubr.bf16.gmra.mrb[0].mxu0 %v85
    %v169 = vpop.f32.mrb[0].mxu0
    %v170 = vadd.f32 0.0, %v169
    %v171 = vpop.f32.mrb[0].mxu0
    %v172 = vpop.f32.mrb[0].mxu0
    %v173 = vadd.f32 0.0, %v172
    %v174 = vpop.f32.mrb[0].mxu0
    %175 = vdwg.mxu0
    %v176 = vadd.f32 %v61, %v170
    %v177 = vadd.f32 %v62, %v173
    %178 = vst [vmem:[#allocation2] sm:$0xff] %v176
    %179 = vst [vmem:[#allocation2 + $0x8] sm:$0xff] %v177
    // Predicated region
    $region30: #{tpu_custom_call.1} parent=1 // pred_check
      %p180 = pneg %p55
    $region31: #{tpu_custom_call.1} parent=1 // pred_check_branch
      %182 = sbr.rel (%p180) target = $region33
    $region32: #{tpu_custom_call.1} parent=1 // pred_region
      %v183 = vld [vmem:[#allocation2] sm:$0xff]
      %v184 = vld [vmem:[#allocation2 + $0x8] sm:$0xff]
      %v185 = vld [vmem:[#allocation8] sm:$0x1]
      %v187 = vlaneseq
      %v188 = vshrl.u32 %v187, 7
      %v189 = vsub.s32 0, %v188
      %v190 = vrot.slane %v185, %v189
      %v192 = vadd.f32 %v183, %v190
      %v193 = vadd.f32 %v184, %v190
      %194 = vst [vmem:[#allocation9] sm:$0xff] %v192
      %195 = vst [vmem:[#allocation9 + $0x8] sm:$0xff] %v193
    $region33: #{tpu_custom_call.1} parent=1 // pred_fallthru
      _
    // Predicated region
    $region34: #{tpu_custom_call.1} parent=1 // pred_check
      _
    $region35: #{tpu_custom_call.1} parent=1 // pred_check_branch
      %197 = sbr.rel (0) target = $region37
    $region36: #{tpu_custom_call.1} parent=1 // pred_region
      %s199 = ssub.s32 256, 256
      %200 = vsyncadd [#allocation5], %s199
      %s201 = sshll.u32 [#allocation9], 4
      %s202 = int_to_ptr.vmem [resolvable:$true] %s201
      %207 = dma.vmem_to_hbm [thread:$0]  %s202, 256, %s3, [#allocation5], 128, 128, 8
    $region37: #{tpu_custom_call.1} parent=1 // pred_fallthru
      _
    // Predicated region
    $region38: #{tpu_custom_call.1} parent=1 // pred_check
      _
    $region39: #{tpu_custom_call.1} parent=1 // pred_check_branch
      %209 = sbr.rel (0) target = $region41
    $region40: #{tpu_custom_call.1} parent=1 // pred_region
      %210 = dma.done [#allocation5], 256
    $region41: #{tpu_custom_call.1} parent=1 // pred_fallthru
      _
    %211 = vsyncpa [#allocation4], 1
    %212 = vsyncpa [#allocation7], 1
    %213 = vsyncpa [#allocation5], 1

</llo_original>
